<compile_context>
chip_gen: v7x
topology: tpu7x:2x2x1
jax: 0.10.0
libtpu: 0.0.40
codegen_flags: <defaults>
</compile_context>

<pallas_src>
import math

import jax
import jax.numpy as jnp
from jax.experimental import pallas as pl
from jax.experimental.pallas import tpu as pltpu


def _round_up(n, m):
    return ((n + m - 1) // m) * m


def _linear_relu_kernel(x_ref, w_ref, b_ref, o_ref, acc_ref):
    """One (tm, tn) output tile: acc += x_tile @ w_tile over K; bias+ReLU epilogue."""
    k = pl.program_id(2)

    @pl.when(k == 0)
    def _init():
        acc_ref[...] = jnp.zeros_like(acc_ref)

    # Cast the activation tile to the weight compute dtype (bf16) on the fly —
    # x streams from HBM in its native dtype, so there is no extra HBM pass.
    acc_ref[...] += jax.lax.dot_general(
        x_ref[...].astype(w_ref.dtype), w_ref[...],
        dimension_numbers=(((1,), (0,)), ((), ())),      # (tm, tk) @ (tk, tn)
        preferred_element_type=jnp.float32,               # f32 MXU accumulation
    )

    @pl.when(k == pl.num_programs(2) - 1)
    def _finalize():
        o_ref[...] = jnp.maximum(acc_ref[...] + b_ref[...], 0.0).astype(o_ref.dtype)


def _select_tiles(B, F, C, x_itemsize, out_itemsize, budget):
    """Pick (tm, tk, tn) so the buffered working set fits `budget` bytes of VMEM."""
    Bp8 = _round_up(B, 8)
    tm = min(1024, Bp8)                       # large batch tiles: ~85% of HBM roofline
    if Bp8 >= 16:                             # >=2 batch tiles so v7x's 2 TCs both work
        tm = min(tm, _round_up(pl.cdiv(B, 2), 8))

    Cp_res = _round_up(C, 128)                # lane-dense (unmasked) output stores

    def footprint(tm_, tk, tn, w_bufs, b_bufs):
        return (2 * tm_ * tk * x_itemsize          # x tiles (double-buffered, native dtype)
                + w_bufs * tk * tn * 2              # bf16 weight tile(s)
                + b_bufs * tn * 4                   # f32 bias tile(s)
                + 2 * tm_ * tn * out_itemsize       # output tiles (double-buffered)
                + tm_ * tn * 4)                     # f32 accumulator scratch

    # Preferred: whole transposed weight resident in VMEM, single-buffered.
    if footprint(8, F, Cp_res, 1, 1) <= budget:
        tk, tn, resident = F, Cp_res, True
        w_bufs = b_bufs = 1
    else:
        # Large head: stream the weight as (tk, tn) tiles (pipeliner double-buffers).
        tn = Cp_res if Cp_res <= 512 else 512       # 512 = multiple of 256 (v6e/v7x MXU)
        tk = F if F <= 2048 else 2048
        resident = False
        w_bufs = b_bufs = 2

    while tm > 8 and footprint(tm, tk, tn, w_bufs, b_bufs) > budget:
        tm = max(8, _round_up(tm // 2, 8))

    return tm, tk, tn, resident, footprint(tm, tk, tn, w_bufs, b_bufs)


def linear_classifier_forward(x, weight, bias, *, compute_dtype=jnp.bfloat16,
                              out_dtype=None):
    """relu(x @ weight.T + bias).  x: [B, F], weight: [C, F], bias: [C] -> [B, C]."""
    B, F = x.shape
    C, F2 = weight.shape
    assert F == F2
    if out_dtype is None:
        out_dtype = x.dtype           # pass jnp.bfloat16 to halve output writeback

    # Generation-aware VMEM budget (v5e/v6e: 128 MiB; v7x: 64 MiB per TensorCore).
    try:
        vmem_cap = int(pltpu.get_tpu_info().vmem_capacity_bytes)
    except Exception:
        vmem_cap = 64 << 20           # conservative fallback (v7x per-TC capacity)
    budget = max(8 << 20, vmem_cap - (16 << 20))   # headroom for Mosaic scratch

    x_it = jnp.dtype(x.dtype).itemsize
    o_it = jnp.dtype(out_dtype).itemsize
    tm, tk, tn, resident, vmem_needed = _select_tiles(B, F, C, x_it, o_it, budget)

    Fp = _round_up(F, tk)
    Cp = _round_up(C, tn)
    nb, nn, nk = pl.cdiv(B, tm), Cp // tn, Fp // tk

    # One-time parameter prep: transpose to (F, C) layout, zero-pad, bf16 weight.
    w_t = jnp.zeros((Fp, Cp), compute_dtype).at[:F, :C].set(
        weight.astype(compute_dtype).T)
    b2d = jnp.zeros((1, Cp), jnp.float32).at[:, :C].set(bias.astype(jnp.float32))

    # x stays as-is: no wrapper cast, no batch padding.  Only the rare large-F
    # streaming path pads the K dimension.
    x_in = x
    if Fp != F:
        # TODO(synk): mask the K tail inside the kernel to avoid this extra HBM pass.
        x_in = jnp.pad(x, ((0, 0), (0, Fp - F)))

    # Scoped-VMEM request: working set + internal-scratch headroom, clamped below
    # physical capacity (never `needed * 2`, which can exceed v7x's 64 MiB).
    vmem_limit = int(max(32 << 20, min(vmem_cap - (1 << 20),
                                       vmem_needed + (16 << 20))))

    def build(single_buffer):
        resident_kwargs = (dict(pipeline_mode=pl.Buffered(1))
                           if single_buffer else {})
        grid_spec = pltpu.PrefetchScalarGridSpec(
            num_scalar_prefetch=0,
            grid=(nb, nn, nk),
            in_specs=[
                pl.BlockSpec((tm, tk), lambda i, j, k: (i, k)),                      # x
                pl.BlockSpec((tk, tn), lambda i, j, k: (k, j), **resident_kwargs),   # W^T
                pl.BlockSpec((1, tn), lambda i, j, k: (0, j), **resident_kwargs),    # bias
            ],
            out_specs=pl.BlockSpec((tm, tn), lambda i, j, k: (i, j)),
            scratch_shapes=[pltpu.VMEM((tm, tn), jnp.float32)],
        )
        return pl.pallas_call(
            _linear_relu_kernel,
            out_shape=jax.ShapeDtypeStruct((B, Cp), out_dtype),
            grid_spec=grid_spec,
            compiler_params=pltpu.CompilerParams(
                dimension_semantics=("parallel", "parallel", "arbitrary"),
                vmem_limit_bytes=vmem_limit,
            ),
        )

    if resident and nn == 1 and nk == 1:
        # Constant-index weight/bias blocks: single-buffer them (halves their VMEM).
        try:
            out = build(True)(x_in, w_t, b2d)
        except Exception:
            # pipeline_mode=pl.Buffered not supported by this JAX version; fall back.
            out = build(False)(x_in, w_t, b2d)
    else:
        out = build(False)(x_in, w_t, b2d)

    # Batch is never padded; slice classes only when padded to a lane multiple.
    # TODO(synk): fuse the downstream op (softmax/argmax) into the kernel epilogue
    # so only [B, C] (or less) is ever written to HBM.
    if Cp != C:
        out = out[:, :C]
    return out


if __name__ == "__main__":
    key = jax.random.PRNGKey(0)
    k_x, k_w, k_b = jax.random.split(key, 3)

    batch, in_features, n_classes = 8, 32, 16

    # Mirror LinearClassifier.reset_parameters(): weight ~ U(-1/sqrt(F), 1/sqrt(F));
    # bias init is undefined in the PyTorch module, so init it deterministically too.
    stdv = 1.0 / math.sqrt(in_features)
    weight = jax.random.uniform(k_w, (n_classes, in_features), jnp.float32,
                                minval=-stdv, maxval=stdv)
    bias = jax.random.uniform(k_b, (n_classes,), jnp.float32,
                              minval=-stdv, maxval=stdv)
    x = jax.random.normal(k_x, (batch, in_features), jnp.float32)

    out = linear_classifier_forward(x, weight, bias)
    out = jax.block_until_ready(out)

    # Reference with the same bf16 rounding of the MXU inputs (f32 accumulate).
    x_r = x.astype(jnp.bfloat16).astype(jnp.float32)
    w_r = weight.astype(jnp.bfloat16).astype(jnp.float32)
    ref = jnp.maximum(x_r @ w_r.T + bias[None, :], 0.0)

    assert out.shape == (batch, n_classes)
    assert jnp.allclose(out, ref, atol=1e-4, rtol=1e-4)

    print("KERNEL_OK")
</pallas_src>

<mosaic_0001>
module attributes {stable_mosaic.version = 11 : i64} {
  func.func @_linear_relu_kernel(%arg0: i32, %arg1: i32, %arg2: i32, %arg3: memref<8x32xf32, #tpu.memory_space<vmem>>, %arg4: memref<32x128xbf16, #tpu.memory_space<vmem>>, %arg5: memref<1x128xf32, #tpu.memory_space<vmem>>, %arg6: memref<8x128xf32, #tpu.memory_space<vmem>>, %arg7: memref<8x128xf32, #tpu.memory_space<vmem>>) attributes {dimension_semantics = [#tpu.dimension_semantics<parallel>, #tpu.dimension_semantics<parallel>, #tpu.dimension_semantics<arbitrary>], iteration_bounds = array<i64: 1, 1, 1>, scalar_prefetch = 0 : i64, scratch_operands = 1 : i64, tpu.core_type = #tpu.core_type<tc>, window_params = [{transform_indices = @transform_0, window_bounds = array<i64: 8, 32>}, {pipeline_mode = #tpu.pipeline_mode<synchronous>, transform_indices = @transform_1, window_bounds = array<i64: 32, 128>}, {pipeline_mode = #tpu.pipeline_mode<synchronous>, transform_indices = @transform_2, window_bounds = array<i64: 1, 128>}, {transform_indices = @transform_3, window_bounds = array<i64: 8, 128>}]} {
    %c0_i32 = arith.constant 0 : i32
    %0 = arith.cmpi eq, %arg2, %c0_i32 : i32
    %1 = arith.extui %0 : i1 to i32
    %c0_i32_0 = arith.constant 0 : i32
    %2 = arith.cmpi ne, %1, %c0_i32_0 : i32
    scf.if %2 {
      %cst_10 = arith.constant 0.000000e+00 : f32
      %13 = vector.broadcast %cst_10 : f32 to vector<8x128xf32>
      %c0_11 = arith.constant 0 : index
      %c0_12 = arith.constant 0 : index
      %14 = vector.load %arg7[%c0_11, %c0_12] : memref<8x128xf32, #tpu.memory_space<vmem>>, vector<8x128xf32>
      tpu.vector_store %arg7[%c0_11, %c0_12], %13 {strides = array<i32>} : memref<8x128xf32, #tpu.memory_space<vmem>>, vector<8x128xf32>,
    } else {
    }
    %c0 = arith.constant 0 : index
    %c0_1 = arith.constant 0 : index
    %3 = vector.load %arg7[%c0, %c0_1] : memref<8x128xf32, #tpu.memory_space<vmem>>, vector<8x128xf32>
    %c0_2 = arith.constant 0 : index
    %c0_3 = arith.constant 0 : index
    %4 = vector.load %arg3[%c0_2, %c0_3] : memref<8x32xf32, #tpu.memory_space<vmem>>, vector<8x32xf32>
    %5 = arith.truncf %4 : vector<8x32xf32> to vector<8x32xbf16>
    %c0_4 = arith.constant 0 : index
    %c0_5 = arith.constant 0 : index
    %6 = vector.load %arg4[%c0_4, %c0_5] : memref<32x128xbf16, #tpu.memory_space<vmem>>, vector<32x128xbf16>
    %cst = arith.constant dense<0.000000e+00> : vector<8x128xf32>
    %7 = tpu.matmul %5, %6, %cst {dimension_numbers = #tpu.dot_dimension_numbers<[1], [0], [0], [1], [0, 0, 1, 1], [], []>} : vector<8x32xbf16>, vector<32x128xbf16>, vector<8x128xf32> -> vector<8x128xf32>
    %8 = arith.addf %3, %7 : vector<8x128xf32>
    %c0_6 = arith.constant 0 : index
    %c0_7 = arith.constant 0 : index
    %9 = vector.load %arg7[%c0_6, %c0_7] : memref<8x128xf32, #tpu.memory_space<vmem>>, vector<8x128xf32>
    tpu.vector_store %arg7[%c0_6, %c0_7], %8 {strides = array<i32>} : memref<8x128xf32, #tpu.memory_space<vmem>>, vector<8x128xf32>,
    %c0_i32_8 = arith.constant 0 : i32
    %10 = arith.cmpi eq, %arg2, %c0_i32_8 : i32
    %11 = arith.extui %10 : i1 to i32
    %c0_i32_9 = arith.constant 0 : i32
    %12 = arith.cmpi ne, %11, %c0_i32_9 : i32
    scf.if %12 {
      %c0_10 = arith.constant 0 : index
      %c0_11 = arith.constant 0 : index
      %13 = vector.load %arg7[%c0_10, %c0_11] : memref<8x128xf32, #tpu.memory_space<vmem>>, vector<8x128xf32>
      %c0_12 = arith.constant 0 : index
      %c0_13 = arith.constant 0 : index
      %14 = vector.load %arg5[%c0_12, %c0_13] : memref<1x128xf32, #tpu.memory_space<vmem>>, vector<1x128xf32>
      %15 = vector.broadcast %14 : vector<1x128xf32> to vector<8x128xf32>
      %16 = arith.addf %13, %15 : vector<8x128xf32>
      %cst_14 = arith.constant 0.000000e+00 : f32
      %17 = vector.broadcast %cst_14 : f32 to vector<8x128xf32>
      %18 = arith.maximumf %16, %17 : vector<8x128xf32>
      %c0_15 = arith.constant 0 : index
      %c0_16 = arith.constant 0 : index
      %19 = vector.load %arg6[%c0_15, %c0_16] : memref<8x128xf32, #tpu.memory_space<vmem>>, vector<8x128xf32>
      tpu.vector_store %arg6[%c0_15, %c0_16], %18 {strides = array<i32>} : memref<8x128xf32, #tpu.memory_space<vmem>>, vector<8x128xf32>,
    } else {
    }
    return
  }
  func.func @transform_0(%arg0: i32, %arg1: i32, %arg2: i32) -> (i32, i32) {
    %c0_i32 = arith.constant 0 : i32
    return %arg0, %arg2 : i32, i32
  }
  func.func @transform_1(%arg0: i32, %arg1: i32, %arg2: i32) -> (i32, i32) {
    %c0_i32 = arith.constant 0 : i32
    return %arg2, %arg1 : i32, i32
  }
  func.func @transform_2(%arg0: i32, %arg1: i32, %arg2: i32) -> (i32, i32) {
    %c0_i32 = arith.constant 0 : i32
    %c0_i32_0 = arith.constant 0 : i32
    return %c0_i32, %arg1 : i32, i32
  }
  func.func @transform_3(%arg0: i32, %arg1: i32, %arg2: i32) -> (i32, i32) {
    %c0_i32 = arith.constant 0 : i32
    return %arg0, %arg1 : i32, i32
  }
}

module attributes {stable_mosaic.version = 11 : i64} {
  func.func @_linear_relu_kernel(%arg0: i32, %arg1: i32, %arg2: i32, %arg3: memref<8x32xf32, #tpu.memory_space<vmem>>, %arg4: memref<32x128xbf16, #tpu.memory_space<vmem>>, %arg5: memref<1x128xf32, #tpu.memory_space<vmem>>, %arg6: memref<8x128xf32, #tpu.memory_space<vmem>>, %arg7: memref<8x128xf32, #tpu.memory_space<vmem>>) attributes {dimension_semantics = [#tpu.dimension_semantics<parallel>, #tpu.dimension_semantics<parallel>, #tpu.dimension_semantics<arbitrary>], iteration_bounds = array<i64: 1, 1, 1>, scalar_prefetch = 0 : i64, scratch_operands = 1 : i64, tpu.core_type = #tpu.core_type<tc>, window_params = [{transform_indices = @transform_0, window_bounds = array<i64: 8, 32>}, {transform_indices = @transform_1, window_bounds = array<i64: 32, 128>}, {transform_indices = @transform_2, window_bounds = array<i64: 1, 128>}, {transform_indices = @transform_3, window_bounds = array<i64: 8, 128>}]} {
    %c0_i32 = arith.constant 0 : i32
    %0 = arith.cmpi eq, %arg2, %c0_i32 : i32
    %1 = arith.extui %0 : i1 to i32
    %c0_i32_0 = arith.constant 0 : i32
    %2 = arith.cmpi ne, %1, %c0_i32_0 : i32
    scf.if %2 {
      %cst_10 = arith.constant 0.000000e+00 : f32
      %13 = vector.broadcast %cst_10 : f32 to vector<8x128xf32>
      %c0_11 = arith.constant 0 : index
      %c0_12 = arith.constant 0 : index
      %14 = vector.load %arg7[%c0_11, %c0_12] : memref<8x128xf32, #tpu.memory_space<vmem>>, vector<8x128xf32>
      tpu.vector_store %arg7[%c0_11, %c0_12], %13 {strides = array<i32>} : memref<8x128xf32, #tpu.memory_space<vmem>>, vector<8x128xf32>,
    } else {
    }
    %c0 = arith.constant 0 : index
    %c0_1 = arith.constant 0 : index
    %3 = vector.load %arg7[%c0, %c0_1] : memref<8x128xf32, #tpu.memory_space<vmem>>, vector<8x128xf32>
    %c0_2 = arith.constant 0 : index
    %c0_3 = arith.constant 0 : index
    %4 = vector.load %arg3[%c0_2, %c0_3] : memref<8x32xf32, #tpu.memory_space<vmem>>, vector<8x32xf32>
    %5 = arith.truncf %4 : vector<8x32xf32> to vector<8x32xbf16>
    %c0_4 = arith.constant 0 : index
    %c0_5 = arith.constant 0 : index
    %6 = vector.load %arg4[%c0_4, %c0_5] : memref<32x128xbf16, #tpu.memory_space<vmem>>, vector<32x128xbf16>
    %cst = arith.constant dense<0.000000e+00> : vector<8x128xf32>
    %7 = tpu.matmul %5, %6, %cst {dimension_numbers = #tpu.dot_dimension_numbers<[1], [0], [0], [1], [0, 0, 1, 1], [], []>} : vector<8x32xbf16>, vector<32x128xbf16>, vector<8x128xf32> -> vector<8x128xf32>
    %8 = arith.addf %3, %7 : vector<8x128xf32>
    %c0_6 = arith.constant 0 : index
    %c0_7 = arith.constant 0 : index
    %9 = vector.load %arg7[%c0_6, %c0_7] : memref<8x128xf32, #tpu.memory_space<vmem>>, vector<8x128xf32>
    tpu.vector_store %arg7[%c0_6, %c0_7], %8 {strides = array<i32>} : memref<8x128xf32, #tpu.memory_space<vmem>>, vector<8x128xf32>,
    %c0_i32_8 = arith.constant 0 : i32
    %10 = arith.cmpi eq, %arg2, %c0_i32_8 : i32
    %11 = arith.extui %10 : i1 to i32
    %c0_i32_9 = arith.constant 0 : i32
    %12 = arith.cmpi ne, %11, %c0_i32_9 : i32
    scf.if %12 {
      %c0_10 = arith.constant 0 : index
      %c0_11 = arith.constant 0 : index
      %13 = vector.load %arg7[%c0_10, %c0_11] : memref<8x128xf32, #tpu.memory_space<vmem>>, vector<8x128xf32>
      %c0_12 = arith.constant 0 : index
      %c0_13 = arith.constant 0 : index
      %14 = vector.load %arg5[%c0_12, %c0_13] : memref<1x128xf32, #tpu.memory_space<vmem>>, vector<1x128xf32>
      %15 = vector.broadcast %14 : vector<1x128xf32> to vector<8x128xf32>
      %16 = arith.addf %13, %15 : vector<8x128xf32>
      %cst_14 = arith.constant 0.000000e+00 : f32
      %17 = vector.broadcast %cst_14 : f32 to vector<8x128xf32>
      %18 = arith.maximumf %16, %17 : vector<8x128xf32>
      %c0_15 = arith.constant 0 : index
      %c0_16 = arith.constant 0 : index
      %19 = vector.load %arg6[%c0_15, %c0_16] : memref<8x128xf32, #tpu.memory_space<vmem>>, vector<8x128xf32>
      tpu.vector_store %arg6[%c0_15, %c0_16], %18 {strides = array<i32>} : memref<8x128xf32, #tpu.memory_space<vmem>>, vector<8x128xf32>,
    } else {
    }
    return
  }
  func.func @transform_0(%arg0: i32, %arg1: i32, %arg2: i32) -> (i32, i32) {
    %c0_i32 = arith.constant 0 : i32
    return %arg0, %arg2 : i32, i32
  }
  func.func @transform_1(%arg0: i32, %arg1: i32, %arg2: i32) -> (i32, i32) {
    %c0_i32 = arith.constant 0 : i32
    return %arg2, %arg1 : i32, i32
  }
  func.func @transform_2(%arg0: i32, %arg1: i32, %arg2: i32) -> (i32, i32) {
    %c0_i32 = arith.constant 0 : i32
    %c0_i32_0 = arith.constant 0 : i32
    return %c0_i32, %arg1 : i32, i32
  }
  func.func @transform_3(%arg0: i32, %arg1: i32, %arg2: i32) -> (i32, i32) {
    %c0_i32 = arith.constant 0 : i32
    return %arg0, %arg1 : i32, i32
  }
}

</mosaic_0001>

<llo_original>
// kernel: tpu_custom_call.1
$region0: #{tpu_custom_call.1}
  #allocation0 [shape = 'u32[]', space=smem, size = 0x4, offset = 0x4, fixed_abs, tag = 'smem constant byte address 0x4 - core index']
  #allocation1 [shape = 'u32[144,128]{1,0:T(1,128)}', space=vmem, size = 0x12000, scoped, tag = 'internal scratch']
  #allocation2 [shape = 'f32[8,128]{1,0:T(8,128)}', space=vmem, size = 0x1000, scoped, tag = 'scratch operand']
  %s0 = inlined_call_operand.hbm [shape: f32[8,32], index: 0, kind: input, shape index: {}]
  %s1 = inlined_call_operand.hbm [shape: bf16[32,128], index: 1, kind: input, shape index: {}]
  %s2 = inlined_call_operand.vmem [shape: f32[1,128], index: 2, kind: input, shape index: {}]
  %s3 = inlined_call_operand.hbm [shape: f32[8,128], index: 3, kind: output, shape index: {}]
  %s4 = sld [smem:[#allocation0]]
  $region38: #{tpu_custom_call.1} parent=0
    _
  %s6 = ssub.s32 1, %s4
  %s7 = scalar_select 0, %s6, %s4
  $region1: #{tpu_custom_call.1} parent=0
    #allocation3 [shape = 'u8[4096]{0}', space=vmem, size = 0x1000, scoped, tag = 'input window, operand 0, single buffered']
    #allocation4 [shape = 's32[1]{0}', space=sflag, size = 0x4, scoped, tag = 'scoped memory for tpu_custom_call.1']
    #allocation5 [shape = 's32[1]{0}', space=sflag, size = 0x4, scoped, tag = 'scoped memory for tpu_custom_call.1']
    #allocation6 [shape = 'u8[8192]{0}', space=vmem, size = 0x2000, scoped, tag = 'input window, operand 1, single buffered']
    #allocation7 [shape = 's32[1]{0}', space=sflag, size = 0x4, scoped, tag = 'scoped memory for tpu_custom_call.1']
    #allocation8 [shape = 'u8[4096]{0}', space=vmem, size = 0x1000, scoped, tag = 'output window, operand 0, single buffered']
    %8 = vsyncpa [#allocation4], 0
    %9 = vsyncpa [#allocation7], 0
    %10 = vsyncpa [#allocation5], 0
    // Predicated region
    $region2: #{tpu_custom_call.1} parent=1 // pred_check
      _
    $region3: #{tpu_custom_call.1} parent=1 // pred_check_branch
      %12 = sbr.rel (0) target = $region5
    $region4: #{tpu_custom_call.1} parent=1 // pred_region
      %s14 = ssub.s32 128, 128
      %15 = vsyncadd [#allocation4], %s14
      %s17 = sshll.u32 [#allocation3], 4
      %s18 = int_to_ptr.vmem [resolvable:$true] %s17
      %20 = dma.hbm_to_vmem [thread:$0]  %s0, 128, %s18, [#allocation4]
    $region5: #{tpu_custom_call.1} parent=1 // pred_fallthru
      _
    // Predicated region
    $region6: #{tpu_custom_call.1} parent=1 // pred_check
      _
    $region7: #{tpu_custom_call.1} parent=1 // pred_check_branch
      %22 = sbr.rel (0) target = $region9
    $region8: #{tpu_custom_call.1} parent=1 // pred_region
      %s24 = ssub.s32 256, 256
      %25 = vsyncadd [#allocation7], %s24
      %s26 = sshll.u32 [#allocation6], 4
      %s27 = int_to_ptr.vmem [resolvable:$true] %s26
      %32 = dma.hbm_to_vmem [thread:$0]  %s1, 256, %s27, [#allocation7], 64, 64, 4
    $region9: #{tpu_custom_call.1} parent=1 // pred_fallthru
      _
    // Predicated region
    $region10: #{tpu_custom_call.1} parent=1 // pred_check
      _
    $region11: #{tpu_custom_call.1} parent=1 // pred_check_branch
      %34 = sbr.rel (0) target = $region13
    $region12: #{tpu_custom_call.1} parent=1 // pred_region
      _
    $region13: #{tpu_custom_call.1} parent=1 // pred_fallthru
      _
    // Predicated region
    $region14: #{tpu_custom_call.1} parent=1 // pred_check
      _
    $region15: #{tpu_custom_call.1} parent=1 // pred_check_branch
      %36 = sbr.rel (0) target = $region17
    $region16: #{tpu_custom_call.1} parent=1 // pred_region
      %37 = dma.done [#allocation4], 128
    $region17: #{tpu_custom_call.1} parent=1 // pred_fallthru
      _
    // Predicated region
    $region18: #{tpu_custom_call.1} parent=1 // pred_check
      _
    $region19: #{tpu_custom_call.1} parent=1 // pred_check_branch
      %39 = sbr.rel (0) target = $region21
    $region20: #{tpu_custom_call.1} parent=1 // pred_region
      %40 = dma.done [#allocation7], 256
    $region21: #{tpu_custom_call.1} parent=1 // pred_fallthru
      _
    %p42 = scmp.eq.s32.totalorder 0, 0
    // Predicated region
    $region22: #{tpu_custom_call.1} parent=1 // pred_check
      %p43 = pneg %p42
    $region23: #{tpu_custom_call.1} parent=1 // pred_check_branch
      %45 = sbr.rel (%p43) target = $region25
    $region24: #{tpu_custom_call.1} parent=1 // pred_region
      %46 = vst [vmem:[#allocation2] sm:$0xff] 0.0
    $region25: #{tpu_custom_call.1} parent=1 // pred_fallthru
      _
    %v47 = vld [vmem:[#allocation2] sm:$0xff]
    %v48 = vld [vmem:[#allocation3] sm:$0xff]
    %v49 = vpack.c.bf16 %v48, %v48
    %v50 = vld [vmem:[#allocation6] sm:$0xf]
    %v51 = vld [vmem:[#allocation6 + $0x4] sm:$0xf]
    %v52 = vld [vmem:[#allocation6 + $0x8] sm:$0xf]
    %v53 = vld [vmem:[#allocation6 + $0xc] sm:$0xf]
    %v58 = vunpack.c.l.b16 %v50
    %v59 = vunpack.c.l.b16 %v51
    %v60 = vunpack.c.l.b16 %v52
    %v61 = vunpack.c.l.b16 %v53
    %v62 = vpack.c.b16 %v59, %v58
    %v63 = vpack.c.b16 %v61, %v60
    %vm66 = vcmask 261120
    %v68 = vsel %vm66, %v49, 0
    %70 = vmatprep.subr.bf16.mxu0 0
    %71 = vmatpush1.bf16.msra.mxu0 %v62
    %72 = vmatprep.subr.bf16.mxu0 0
    %73 = vmatpush1.bf16.msra.mxu0 %v63
    %74 = vmatprep.subr.bf16.mxu0 0
    %75 = vmatpush1.bf16.msra.mxu0 0
    %76 = vmatprep.subr.bf16.mxu0 0
    %77 = vmatpush1.bf16.msra.mxu0 0
    %78 = vmatprep.subr.bf16.mxu0 0
    %79 = vmatpush1.bf16.msra.mxu0 0
    %80 = vmatprep.subr.bf16.mxu0 0
    %81 = vmatpush1.bf16.msra.mxu0 0
    %82 = vmatprep.subr.bf16.mxu0 0
    %83 = vmatpush1.bf16.msra.mxu0 0
    %84 = vmatprep.subr.bf16.mxu0 0
    %85 = vmatpush1.bf16.msra.mxu0 0
    %86 = vmatprep.subr.bf16.mxu0 0
    %87 = vmatpush1.bf16.msra.mxu0 0
    %88 = vmatprep.subr.bf16.mxu0 0
    %89 = vmatpush1.bf16.msra.mxu0 0
    %90 = vmatprep.subr.bf16.mxu0 0
    %91 = vmatpush1.bf16.msra.mxu0 0
    %92 = vmatprep.subr.bf16.mxu0 0
    %93 = vmatpush1.bf16.msra.mxu0 0
    %94 = vmatprep.subr.bf16.mxu0 0
    %95 = vmatpush1.bf16.msra.mxu0 0
    %96 = vmatprep.subr.bf16.mxu0 0
    %97 = vmatpush1.bf16.msra.mxu0 0
    %98 = vmatprep.subr.bf16.mxu0 0
    %99 = vmatpush1.bf16.msra.mxu0 0
    %100 = vmatprep.subr.bf16.mxu0 0
    %101 = vmatpush1.bf16.msra.mxu0 0
    %102 = vmatprep.mubr.bf16.mxu0 0
    %103 = vmatmul.mubr.bf16.gmra.mrb[0].mxu0 %v68
    %v104 = vpop.f32.mrb[0].mxu0
    %v105 = vadd.f32 0.0, %v104
    %v106 = vpop.f32.mrb[0].mxu0
    %v107 = vpop.f32.mrb[0].mxu0
    %v108 = vpop.f32.mrb[0].mxu0
    %109 = vdwg.mxu0
    %v110 = vadd.f32 %v47, %v105
    %111 = vst [vmem:[#allocation2] sm:$0xff] %v110
    // Predicated region
    $region26: #{tpu_custom_call.1} parent=1 // pred_check
      %p112 = pneg %p42
    $region27: #{tpu_custom_call.1} parent=1 // pred_check_branch
      %114 = sbr.rel (%p112) target = $region29
    $region28: #{tpu_custom_call.1} parent=1 // pred_region
      %v115 = vld [vmem:[#allocation2] sm:$0xff]
      %v116 = vld [vmem:[%s2] sm:$0x1]
      %v118 = vlaneseq
      %v119 = vshrl.u32 %v118, 7
      %v120 = vsub.s32 0, %v119
      %v121 = vrot.slane %v116, %v120
      %v123 = vadd.f32 %v115, %v121
      %v124 = vmax.f32 %v123, 0.0
      %125 = vst [vmem:[#allocation8] sm:$0xff] %v124
    $region29: #{tpu_custom_call.1} parent=1 // pred_fallthru
      _
    // Predicated region
    $region30: #{tpu_custom_call.1} parent=1 // pred_check
      _
    $region31: #{tpu_custom_call.1} parent=1 // pred_check_branch
      %127 = sbr.rel (0) target = $region33
    $region32: #{tpu_custom_call.1} parent=1 // pred_region
      %s129 = ssub.s32 128, 128
      %130 = vsyncadd [#allocation5], %s129
      %s132 = sshll.u32 [#allocation8], 4
      %s133 = int_to_ptr.vmem [resolvable:$true] %s132
      %135 = dma.vmem_to_hbm [thread:$0]  %s133, 128, %s3, [#allocation5]
    $region33: #{tpu_custom_call.1} parent=1 // pred_fallthru
      _
    // Predicated region
    $region34: #{tpu_custom_call.1} parent=1 // pred_check
      _
    $region35: #{tpu_custom_call.1} parent=1 // pred_check_branch
      %137 = sbr.rel (0) target = $region37
    $region36: #{tpu_custom_call.1} parent=1 // pred_region
      %138 = dma.done [#allocation5], 128
    $region37: #{tpu_custom_call.1} parent=1 // pred_fallthru
      _
    %139 = vsyncpa [#allocation4], 1
    %140 = vsyncpa [#allocation7], 1
    %141 = vsyncpa [#allocation5], 1

// kernel: tpu_custom_call.1
$region0: #{tpu_custom_call.1}
  #allocation0 [shape = 'u32[]', space=smem, size = 0x4, offset = 0x4, fixed_abs, tag = 'smem constant byte address 0x4 - core index']
  #allocation1 [shape = 'u32[144,128]{1,0:T(1,128)}', space=vmem, size = 0x12000, scoped, tag = 'internal scratch']
  #allocation2 [shape = 'f32[8,128]{1,0:T(8,128)}', space=vmem, size = 0x1000, scoped, tag = 'scratch operand']
  %s0 = inlined_call_operand.hbm [shape: f32[8,32], index: 0, kind: input, shape index: {}]
  %s1 = inlined_call_operand.hbm [shape: bf16[32,128], index: 1, kind: input, shape index: {}]
  %s2 = inlined_call_operand.vmem [shape: f32[1,128], index: 2, kind: input, shape index: {}]
  %s3 = inlined_call_operand.hbm [shape: f32[8,128], index: 3, kind: output, shape index: {}]
  %s4 = sld [smem:[#allocation0]]
  $region38: #{tpu_custom_call.1} parent=0
    _
  %s6 = ssub.s32 1, %s4
  %s7 = scalar_select 0, %s6, %s4
  $region1: #{tpu_custom_call.1} parent=0
    #allocation3 [shape = 'u8[4096]{0}', space=vmem, size = 0x1000, scoped, tag = 'input window, operand 0, single buffered']
    #allocation4 [shape = 's32[1]{0}', space=sflag, size = 0x4, scoped, tag = 'scoped memory for tpu_custom_call.1']
    #allocation5 [shape = 's32[1]{0}', space=sflag, size = 0x4, scoped, tag = 'scoped memory for tpu_custom_call.1']
    #allocation6 [shape = 'u8[8192]{0}', space=vmem, size = 0x2000, scoped, tag = 'input window, operand 1, single buffered']
    #allocation7 [shape = 's32[1]{0}', space=sflag, size = 0x4, scoped, tag = 'scoped memory for tpu_custom_call.1']
    #allocation8 [shape = 'u8[4096]{0}', space=vmem, size = 0x1000, scoped, tag = 'output window, operand 0, single buffered']
    %8 = vsyncpa [#allocation4], 0
    %9 = vsyncpa [#allocation7], 0
    %10 = vsyncpa [#allocation5], 0
    // Predicated region
    $region2: #{tpu_custom_call.1} parent=1 // pred_check
      _
    $region3: #{tpu_custom_call.1} parent=1 // pred_check_branch
      %12 = sbr.rel (0) target = $region5
    $region4: #{tpu_custom_call.1} parent=1 // pred_region
      %s14 = ssub.s32 128, 128
      %15 = vsyncadd [#allocation4], %s14
      %s17 = sshll.u32 [#allocation3], 4
      %s18 = int_to_ptr.vmem [resolvable:$true] %s17
      %20 = dma.hbm_to_vmem [thread:$0]  %s0, 128, %s18, [#allocation4]
    $region5: #{tpu_custom_call.1} parent=1 // pred_fallthru
      _
    // Predicated region
    $region6: #{tpu_custom_call.1} parent=1 // pred_check
      _
    $region7: #{tpu_custom_call.1} parent=1 // pred_check_branch
      %22 = sbr.rel (0) target = $region9
    $region8: #{tpu_custom_call.1} parent=1 // pred_region
      %s24 = ssub.s32 256, 256
      %25 = vsyncadd [#allocation7], %s24
      %s26 = sshll.u32 [#allocation6], 4
      %s27 = int_to_ptr.vmem [resolvable:$true] %s26
      %32 = dma.hbm_to_vmem [thread:$0]  %s1, 256, %s27, [#allocation7], 64, 64, 4
    $region9: #{tpu_custom_call.1} parent=1 // pred_fallthru
      _
    // Predicated region
    $region10: #{tpu_custom_call.1} parent=1 // pred_check
      _
    $region11: #{tpu_custom_call.1} parent=1 // pred_check_branch
      %34 = sbr.rel (0) target = $region13
    $region12: #{tpu_custom_call.1} parent=1 // pred_region
      _
    $region13: #{tpu_custom_call.1} parent=1 // pred_fallthru
      _
    // Predicated region
    $region14: #{tpu_custom_call.1} parent=1 // pred_check
      _
    $region15: #{tpu_custom_call.1} parent=1 // pred_check_branch
      %36 = sbr.rel (0) target = $region17
    $region16: #{tpu_custom_call.1} parent=1 // pred_region
      %37 = dma.done [#allocation4], 128
    $region17: #{tpu_custom_call.1} parent=1 // pred_fallthru
      _
    // Predicated region
    $region18: #{tpu_custom_call.1} parent=1 // pred_check
      _
    $region19: #{tpu_custom_call.1} parent=1 // pred_check_branch
      %39 = sbr.rel (0) target = $region21
    $region20: #{tpu_custom_call.1} parent=1 // pred_region
      %40 = dma.done [#allocation7], 256
    $region21: #{tpu_custom_call.1} parent=1 // pred_fallthru
      _
    %p42 = scmp.eq.s32.totalorder 0, 0
    // Predicated region
    $region22: #{tpu_custom_call.1} parent=1 // pred_check
      %p43 = pneg %p42
    $region23: #{tpu_custom_call.1} parent=1 // pred_check_branch
      %45 = sbr.rel (%p43) target = $region25
    $region24: #{tpu_custom_call.1} parent=1 // pred_region
      %46 = vst [vmem:[#allocation2] sm:$0xff] 0.0
    $region25: #{tpu_custom_call.1} parent=1 // pred_fallthru
      _
    %v47 = vld [vmem:[#allocation2] sm:$0xff]
    %v48 = vld [vmem:[#allocation3] sm:$0xff]
    %v49 = vpack.c.bf16 %v48, %v48
    %v50 = vld [vmem:[#allocation6] sm:$0xf]
    %v51 = vld [vmem:[#allocation6 + $0x4] sm:$0xf]
    %v52 = vld [vmem:[#allocation6 + $0x8] sm:$0xf]
    %v53 = vld [vmem:[#allocation6 + $0xc] sm:$0xf]
    %v58 = vunpack.c.l.b16 %v50
    %v59 = vunpack.c.l.b16 %v51
    %v60 = vunpack.c.l.b16 %v52
    %v61 = vunpack.c.l.b16 %v53
    %v62 = vpack.c.b16 %v59, %v58
    %v63 = vpack.c.b16 %v61, %v60
    %vm66 = vcmask 261120
    %v68 = vsel %vm66, %v49, 0
    %70 = vmatprep.subr.bf16.mxu0 0
    %71 = vmatpush1.bf16.msra.mxu0 %v62
    %72 = vmatprep.subr.bf16.mxu0 0
    %73 = vmatpush1.bf16.msra.mxu0 %v63
    %74 = vmatprep.subr.bf16.mxu0 0
    %75 = vmatpush1.bf16.msra.mxu0 0
    %76 = vmatprep.subr.bf16.mxu0 0
    %77 = vmatpush1.bf16.msra.mxu0 0
    %78 = vmatprep.subr.bf16.mxu0 0
    %79 = vmatpush1.bf16.msra.mxu0 0
    %80 = vmatprep.subr.bf16.mxu0 0
    %81 = vmatpush1.bf16.msra.mxu0 0
    %82 = vmatprep.subr.bf16.mxu0 0
    %83 = vmatpush1.bf16.msra.mxu0 0
    %84 = vmatprep.subr.bf16.mxu0 0
    %85 = vmatpush1.bf16.msra.mxu0 0
    %86 = vmatprep.subr.bf16.mxu0 0
    %87 = vmatpush1.bf16.msra.mxu0 0
    %88 = vmatprep.subr.bf16.mxu0 0
    %89 = vmatpush1.bf16.msra.mxu0 0
    %90 = vmatprep.subr.bf16.mxu0 0
    %91 = vmatpush1.bf16.msra.mxu0 0
    %92 = vmatprep.subr.bf16.mxu0 0
    %93 = vmatpush1.bf16.msra.mxu0 0
    %94 = vmatprep.subr.bf16.mxu0 0
    %95 = vmatpush1.bf16.msra.mxu0 0
    %96 = vmatprep.subr.bf16.mxu0 0
    %97 = vmatpush1.bf16.msra.mxu0 0
    %98 = vmatprep.subr.bf16.mxu0 0
    %99 = vmatpush1.bf16.msra.mxu0 0
    %100 = vmatprep.subr.bf16.mxu0 0
    %101 = vmatpush1.bf16.msra.mxu0 0
    %102 = vmatprep.mubr.bf16.mxu0 0
    %103 = vmatmul.mubr.bf16.gmra.mrb[0].mxu0 %v68
    %v104 = vpop.f32.mrb[0].mxu0
    %v105 = vadd.f32 0.0, %v104
    %v106 = vpop.f32.mrb[0].mxu0
    %v107 = vpop.f32.mrb[0].mxu0
    %v108 = vpop.f32.mrb[0].mxu0
    %109 = vdwg.mxu0
    %v110 = vadd.f32 %v47, %v105
    %111 = vst [vmem:[#allocation2] sm:$0xff] %v110
    // Predicated region
    $region26: #{tpu_custom_call.1} parent=1 // pred_check
      %p112 = pneg %p42
    $region27: #{tpu_custom_call.1} parent=1 // pred_check_branch
      %114 = sbr.rel (%p112) target = $region29
    $region28: #{tpu_custom_call.1} parent=1 // pred_region
      %v115 = vld [vmem:[#allocation2] sm:$0xff]
      %v116 = vld [vmem:[%s2] sm:$0x1]
      %v118 = vlaneseq
      %v119 = vshrl.u32 %v118, 7
      %v120 = vsub.s32 0, %v119
      %v121 = vrot.slane %v116, %v120
      %v123 = vadd.f32 %v115, %v121
      %v124 = vmax.f32 %v123, 0.0
      %125 = vst [vmem:[#allocation8] sm:$0xff] %v124
    $region29: #{tpu_custom_call.1} parent=1 // pred_fallthru
      _
    // Predicated region
    $region30: #{tpu_custom_call.1} parent=1 // pred_check
      _
    $region31: #{tpu_custom_call.1} parent=1 // pred_check_branch
      %127 = sbr.rel (0) target = $region33
    $region32: #{tpu_custom_call.1} parent=1 // pred_region
      %s129 = ssub.s32 128, 128
      %130 = vsyncadd [#allocation5], %s129
      %s132 = sshll.u32 [#allocation8], 4
      %s133 = int_to_ptr.vmem [resolvable:$true] %s132
      %135 = dma.vmem_to_hbm [thread:$0]  %s133, 128, %s3, [#allocation5]
    $region33: #{tpu_custom_call.1} parent=1 // pred_fallthru
      _
    // Predicated region
    $region34: #{tpu_custom_call.1} parent=1 // pred_check
      _
    $region35: #{tpu_custom_call.1} parent=1 // pred_check_branch
      %137 = sbr.rel (0) target = $region37
    $region36: #{tpu_custom_call.1} parent=1 // pred_region
      %138 = dma.done [#allocation5], 128
    $region37: #{tpu_custom_call.1} parent=1 // pred_fallthru
      _
    %139 = vsyncpa [#allocation4], 1
    %140 = vsyncpa [#allocation7], 1
    %141 = vsyncpa [#allocation5], 1

</llo_original>
